<compile_context>
chip_gen: v5e
topology: v5e:2x2
jax: 0.10.0
libtpu: 0.0.40
codegen_flags: <defaults>
</compile_context>

<pallas_src>
import functools

import jax
import jax.numpy as jnp
from jax.experimental import pallas as pl
from jax.experimental.pallas import tpu as pltpu

# --- config (mirrors `config.HIDDEN_DIM` in the original module) ---
HIDDEN_DIM = 32
NUM_CLASSES = 16
BATCH = 2
SEQ = 8

_SUBLANE = 8


def _linear_decoder_kernel(x_ref, w_ref, b_ref, o_ref):
    # x_ref: (tm, H)   streamed tile of flattened tokens
    # w_ref: (H, N)    VMEM-resident, pre-transposed weight
    # b_ref: (1, N)    VMEM-resident bias row
    # o_ref: (tm, N)   output tile (N = real num_classes, no lane padding)
    acc = jnp.dot(x_ref[...], w_ref[...], preferred_element_type=jnp.float32)
    # f32 bias add + single final downcast (v5e-friendly epilogue: no bf16 VPU).
    o_ref[...] = (acc + b_ref[...]).astype(o_ref.dtype)


def prepare_params(weight, bias):
    """One-time (offline) packing of nn.Linear params.

    weight: (num_classes, hidden), bias: (num_classes,)
    Returns w_t: (hidden, num_classes) pre-transposed, b_row: (1, num_classes).
    """
    w_t = jnp.asarray(weight).T                      # (H, N) — MXU-friendly layout
    b_row = jnp.asarray(bias).reshape(1, -1)         # (1, N)
    return w_t, b_row


def _pick_tm(m8, tm_max):
    """Pick a sublane-aligned tile that avoids a mostly-padding last tile."""
    cap = max(_SUBLANE, (min(tm_max, m8) // _SUBLANE) * _SUBLANE)
    for tm in range(cap, _SUBLANE - 1, -_SUBLANE):   # prefer an exact divisor
        if m8 % tm == 0:
            if 2 * tm >= cap:                        # only if it isn't tiny
                return tm
            break
    return cap                                       # fall back: pad last tile


@functools.partial(jax.jit, static_argnames=("tm_max",))
def linear_decoder(encoder_output, w_t, b_row, *, tm_max=2048):
    """encoder_output: [B, S, H]; w_t/b_row from prepare_params()."""
    B, S, H = encoder_output.shape
    N = w_t.shape[1]
    M = B * S
    x2d = encoder_output.reshape(M, H)

    m8 = pl.cdiv(M, _SUBLANE) * _SUBLANE
    tm = _pick_tm(m8, tm_max)
    m_pad = pl.cdiv(M, tm) * tm
    if m_pad != M:
        x2d = jnp.zeros((m_pad, H), x2d.dtype).at[:M, :].set(x2d)
    grid_m = m_pad // tm

    # VMEM budget: Pallas double-buffers every in/out spec (including the
    # constant-index W and bias), so count 2x each, real itemsize, 2x headroom.
    itemsize = jnp.dtype(encoder_output.dtype).itemsize
    vmem_bytes = 2 * (tm * H + H * N + N + tm * N) * itemsize
    vmem_limit = int(min(max(2 * vmem_bytes, 4 << 20), 64 << 20))

    out2d = pl.pallas_call(
        _linear_decoder_kernel,
        out_shape=jax.ShapeDtypeStruct((m_pad, N), encoder_output.dtype),
        grid_spec=pltpu.PrefetchScalarGridSpec(
            num_scalar_prefetch=0,
            grid=(grid_m,),
            in_specs=[
                pl.BlockSpec((tm, H), lambda i: (i, 0)),   # streamed x tile
                pl.BlockSpec((H, N), lambda i: (0, 0)),    # resident weight (K,N)
                pl.BlockSpec((1, N), lambda i: (0, 0)),    # resident bias
            ],
            out_specs=pl.BlockSpec((tm, N), lambda i: (i, 0)),
        ),
        compiler_params=pltpu.CompilerParams(
            # No-op at grid_m == 1; shards M across TCs on v7x once M is large.
            dimension_semantics=("parallel",),
            vmem_limit_bytes=vmem_limit,
        ),
    )(x2d, w_t, b_row)

    # Strip M padding (if any) outside the kernel; N is already exact.
    return out2d[:M, :].reshape(B, S, N)


if __name__ == "__main__":
    key = jax.random.PRNGKey(0)
    k_x, k_w = jax.random.split(key)

    # Deterministic parameter init mirroring init_weights():
    #   weight ~ U(-0.1, 0.1), bias = 0
    initrange = 0.1
    weight = jax.random.uniform(
        k_w, (NUM_CLASSES, HIDDEN_DIM), dtype=jnp.float32,
        minval=-initrange, maxval=initrange)
    bias = jnp.zeros((NUM_CLASSES,), dtype=jnp.float32)

    encoder_output = jax.random.normal(
        k_x, (BATCH, SEQ, HIDDEN_DIM), dtype=jnp.float32)

    # Pack params once (outside the per-step hot path).
    w_t, b_row = prepare_params(weight, bias)

    out = linear_decoder(encoder_output, w_t, b_row)
    out = jax.block_until_ready(out)

    # Correctness check against plain JAX reference (forward semantics of
    # Linear_Decoder: output = encoder_output @ W^T + b).
    ref = encoder_output @ weight.T + bias
    assert out.shape == (BATCH, SEQ, NUM_CLASSES)
    assert jnp.allclose(out, ref, atol=1e-5, rtol=1e-5)
    print("KERNEL_OK")
</pallas_src>

<mosaic_0001>
module attributes {stable_mosaic.version = 11 : i64} {
  func.func @_linear_decoder_kernel(%arg0: i32, %arg1: memref<16x32xf32, #tpu.memory_space<vmem>>, %arg2: memref<32x16xf32, #tpu.memory_space<vmem>>, %arg3: memref<1x16xf32, #tpu.memory_space<vmem>>, %arg4: memref<16x16xf32, #tpu.memory_space<vmem>>) attributes {dimension_semantics = [#tpu.dimension_semantics<parallel>], iteration_bounds = array<i64: 1>, scalar_prefetch = 0 : i64, scratch_operands = 0 : i64, tpu.core_type = #tpu.core_type<tc>, window_params = [{transform_indices = @transform_0, window_bounds = array<i64: 16, 32>}, {pipeline_mode = #tpu.pipeline_mode<synchronous>, transform_indices = @transform_1, window_bounds = array<i64: 32, 16>}, {pipeline_mode = #tpu.pipeline_mode<synchronous>, transform_indices = @transform_2, window_bounds = array<i64: 1, 16>}, {transform_indices = @transform_3, window_bounds = array<i64: 16, 16>}]} {
    %c0 = arith.constant 0 : index
    %c0_0 = arith.constant 0 : index
    %0 = vector.load %arg1[%c0, %c0_0] : memref<16x32xf32, #tpu.memory_space<vmem>>, vector<16x32xf32>
    %c0_1 = arith.constant 0 : index
    %c0_2 = arith.constant 0 : index
    %1 = vector.load %arg2[%c0_1, %c0_2] : memref<32x16xf32, #tpu.memory_space<vmem>>, vector<32x16xf32>
    %cst = arith.constant dense<0.000000e+00> : vector<16x16xf32>
    %2 = tpu.matmul %0, %1, %cst {dimension_numbers = #tpu.dot_dimension_numbers<[1], [0], [0], [1], [0, 0, 1, 1], [], []>} : vector<16x32xf32>, vector<32x16xf32>, vector<16x16xf32> -> vector<16x16xf32>
    %c0_3 = arith.constant 0 : index
    %c0_4 = arith.constant 0 : index
    %3 = vector.load %arg3[%c0_3, %c0_4] : memref<1x16xf32, #tpu.memory_space<vmem>>, vector<1x16xf32>
    %4 = vector.broadcast %3 : vector<1x16xf32> to vector<16x16xf32>
    %5 = arith.addf %2, %4 : vector<16x16xf32>
    %c0_5 = arith.constant 0 : index
    %c0_6 = arith.constant 0 : index
    %6 = vector.load %arg4[%c0_5, %c0_6] : memref<16x16xf32, #tpu.memory_space<vmem>>, vector<16x16xf32>
    tpu.vector_store %arg4[%c0_5, %c0_6], %5 {strides = array<i32>} : memref<16x16xf32, #tpu.memory_space<vmem>>, vector<16x16xf32>,
    return
  }
  func.func @transform_0(%arg0: i32) -> (i32, i32) {
    %c0_i32 = arith.constant 0 : i32
    %c0_i32_0 = arith.constant 0 : i32
    return %arg0, %c0_i32 : i32, i32
  }
  func.func @transform_1(%arg0: i32) -> (i32, i32) {
    %c0_i32 = arith.constant 0 : i32
    %c0_i32_0 = arith.constant 0 : i32
    %c0_i32_1 = arith.constant 0 : i32
    return %c0_i32, %c0_i32_0 : i32, i32
  }
  func.func @transform_2(%arg0: i32) -> (i32, i32) {
    %c0_i32 = arith.constant 0 : i32
    %c0_i32_0 = arith.constant 0 : i32
    %c0_i32_1 = arith.constant 0 : i32
    return %c0_i32, %c0_i32_0 : i32, i32
  }
  func.func @transform_3(%arg0: i32) -> (i32, i32) {
    %c0_i32 = arith.constant 0 : i32
    %c0_i32_0 = arith.constant 0 : i32
    return %arg0, %c0_i32 : i32, i32
  }
}

</mosaic_0001>

<llo_original>
// kernel: linear_decoder.1
$region0: #{linear_decoder.1}
  #allocation0 [shape = 'u32[]', space=smem, size = 0x4, offset = 0x4, fixed_abs, tag = 'smem constant byte address 0x4 - core index']
  #allocation1 [shape = 'u32[72,128]{1,0:T(1,128)}', space=vmem, size = 0x9000, scoped, tag = 'internal scratch']
  %s0 = inlined_call_operand.vmem [shape: f32[16,32], index: 0, kind: input, shape index: {}]
  %s1 = inlined_call_operand.vmem [shape: f32[32,16], index: 1, kind: input, shape index: {}]
  %s2 = inlined_call_operand.vmem [shape: f32[1,16], index: 2, kind: input, shape index: {}]
  %s3 = inlined_call_operand.hbm [shape: f32[16,16], index: 3, kind: output, shape index: {}]
  %s4 = sld [smem:[#allocation0]]
  $region22: #{linear_decoder.1} parent=0
    _
  %s6 = ssub.s32 1, %s4
  %s7 = scalar_select 0, %s6, %s4
  $region1: #{linear_decoder.1} parent=0
    #allocation2 [shape = 'u8[8192]{0}', space=vmem, size = 0x2000, scoped, tag = 'output window, operand 0, single buffered']
    #allocation3 [shape = 's32[1]{0}', space=sflag, size = 0x4, scoped, tag = 'scoped memory for linear_decoder.1']
    %8 = vsyncpa [#allocation3], 0
    // Predicated region
    $region2: #{linear_decoder.1} parent=1 // pred_check
      _
    $region3: #{linear_decoder.1} parent=1 // pred_check_branch
      %10 = sbr.rel (0) target = $region5
    $region4: #{linear_decoder.1} parent=1 // pred_region
      _
    $region5: #{linear_decoder.1} parent=1 // pred_fallthru
      _
    // Predicated region
    $region6: #{linear_decoder.1} parent=1 // pred_check
      _
    $region7: #{linear_decoder.1} parent=1 // pred_check_branch
      %12 = sbr.rel (0) target = $region9
    $region8: #{linear_decoder.1} parent=1 // pred_region
      _
    $region9: #{linear_decoder.1} parent=1 // pred_fallthru
      _
    // Predicated region
    $region10: #{linear_decoder.1} parent=1 // pred_check
      _
    $region11: #{linear_decoder.1} parent=1 // pred_check_branch
      %14 = sbr.rel (0) target = $region13
    $region12: #{linear_decoder.1} parent=1 // pred_region
      _
    $region13: #{linear_decoder.1} parent=1 // pred_fallthru
      _
    %v15 = vld [vmem:[%s0] sm:$0xff]
    %v16 = vld [vmem:[%s0 + $0x8] sm:$0xff]
    %v17 = vld [vmem:[%s1] sm:$0xff]
    %v18 = vld [vmem:[%s1 + $0x8] sm:$0xff]
    %v19 = vld [vmem:[%s1 + $0x10] sm:$0xff]
    %v20 = vld [vmem:[%s1 + $0x18] sm:$0xff]
    %v21 = vld [vmem:[%s2] sm:$0x1]
    %v23 = vperm.slane %v21, 0
    %vm25 = vcmask 261120
    %v27 = vsel %vm25, %v15, 0
    %v30 = vsel %vm25, %v16, 0
    %32 = vmatpush.msra.mxu0 0.0
    %33 = vmatpush.msra.mxu0 0.0
    %34 = vmatpush.msra.mxu0 0.0
    %35 = vmatpush.msra.mxu0 0.0
    %36 = vmatpush.msra.mxu0 0.0
    %37 = vmatpush.msra.mxu0 0.0
    %38 = vmatpush.msra.mxu0 0.0
    %39 = vmatpush.msra.mxu0 0.0
    %40 = vmatpush.msra.mxu0 0.0
    %41 = vmatpush.msra.mxu0 0.0
    %42 = vmatpush.msra.mxu0 0.0
    %43 = vmatpush.msra.mxu0 0.0
    %44 = vmatpush.msra.mxu0 %v20
    %45 = vmatpush.msra.mxu0 %v19
    %46 = vmatpush.msra.mxu0 %v18
    %47 = vmatpush.msra.mxu0 %v17
    %48 = vmatmul.f32.gmra.mxu0 %v27
    %v49 = vpop.f32.mrf.mxu0
    %v50 = vadd.f32 %v23, %v49
    %51 = vmatmul.f32.gmra.mxu0 %v30
    %v52 = vpop.f32.mrf.mxu0
    %v53 = vadd.f32 %v23, %v52
    %54 = vdwg.mxu0
    %vm55 = vcmask 130048
    %56 = vst.msk [vmem:[#allocation2] sm:$0xff] %vm55, %v50
    %57 = vst.msk [vmem:[#allocation2 + $0x8] sm:$0xff] %vm55, %v53
    // Predicated region
    $region14: #{linear_decoder.1} parent=1 // pred_check
      _
    $region15: #{linear_decoder.1} parent=1 // pred_check_branch
      %59 = sbr.rel (0) target = $region17
    $region16: #{linear_decoder.1} parent=1 // pred_region
      %61 = vsyncadd [#allocation3], 0
      %s62 = sshll.u32 [#allocation2], 4
      %s63 = int_to_ptr.vmem [resolvable:$true] %s62
      %s64 = sshll.u32 %s3, 4
      %s65 = int_to_ptr.hbm [resolvable:$true] %s64
      %70 = dma.vmem_to_hbm [thread:$0]  %s63, 256, %s65, [#allocation3], 128, 128, 8
    $region17: #{linear_decoder.1} parent=1 // pred_fallthru
      _
    // Predicated region
    $region18: #{linear_decoder.1} parent=1 // pred_check
      _
    $region19: #{linear_decoder.1} parent=1 // pred_check_branch
      %72 = sbr.rel (0) target = $region21
    $region20: #{linear_decoder.1} parent=1 // pred_region
      %74 = dma.done [#allocation3], 256
    $region21: #{linear_decoder.1} parent=1 // pred_fallthru
      _
    %75 = vsyncpa [#allocation3], 1

</llo_original>
